<compile_context>
chip_gen: v7x
topology: tpu7x:2x2x1
jax: 0.10.0
libtpu: 0.0.40
codegen_flags: <defaults>
</compile_context>

<pallas_src>
import functools

import jax
import jax.numpy as jnp
from jax.experimental import pallas as pl
from jax.experimental.pallas import tpu as pltpu


def _pick_channel_block(num_pos_feats: int) -> int:
    """Largest channel block <= 128 that divides F (keeps each block half-pure)."""
    for c in (128, 64, 32, 16, 8):
        if num_pos_feats % c == 0:
            return c
    return num_pos_feats  # fallback: one block per half (block == full dim, always legal)


def _pos_embed_kernel(col_ref, row_ref, out_ref, *, ncol_blocks):
    """Build one channel block of the batch-independent (2F, H, W) slab.

    col_ref: (Cblk, 1, W) block of the (F, 1, W) column table (x embedding)
    row_ref: (Cblk, H)    block of the (F, H)    row table    (y embedding)
    out_ref: (Cblk, H, W) output block (NCHW channel slice)
    """
    cblk, h, w = out_ref.shape
    c = pl.program_id(0)

    @pl.when(c < ncol_blocks)
    def _col_half():
        # Channels [0, F): column embedding, constant over h.
        # (Cblk, 1, W) -> (Cblk, H, W): pure sublane broadcast, no relayout.
        out_ref[...] = jnp.broadcast_to(col_ref[...], (cblk, h, w))

    @pl.when(c >= ncol_blocks)
    def _row_half():
        # Channels [F, 2F): row embedding, constant over w.
        # (Cblk, H) -> (Cblk, H, 1) -> (Cblk, H, W): tiny lane-broadcast relayout.
        out_ref[...] = jnp.broadcast_to(row_ref[...][:, :, None], (cblk, h, w))


def position_embedding_learned(col_weight, row_weight, *, batch, height, width,
                               out_dtype=None):
    """Learned 2D position embedding.

    col_weight / row_weight: (100, F) embedding tables (nn.Embedding weights).
    Returns (batch, 2F, height, width); dtype = tables' dtype unless out_dtype given.
    height/width must be <= 100 (same limit as the PyTorch module).
    """
    num_pos_feats = col_weight.shape[-1]
    assert row_weight.shape[-1] == num_pos_feats
    assert height <= row_weight.shape[0] and width <= col_weight.shape[0], (
        "spatial size exceeds the embedding tables (same failure mode as PyTorch)")
    dtype = out_dtype if out_dtype is not None else col_weight.dtype

    cblk = _pick_channel_block(num_pos_feats)
    ncol_blocks = num_pos_feats // cblk
    grid = (2 * ncol_blocks,)

    # Tiny one-off table rearrangements (<= (100, F) each) done once in XLA so
    # the kernel needs no in-kernel transposes.
    col_in = col_weight[:width].astype(dtype).T.reshape(num_pos_feats, 1, width)  # (F,1,W)
    row_in = row_weight[:height].astype(dtype).T                                  # (F,H)

    slab = pl.pallas_call(
        functools.partial(_pos_embed_kernel, ncol_blocks=ncol_blocks),
        out_shape=jax.ShapeDtypeStruct((2 * num_pos_feats, height, width), dtype),
        grid=grid,
        in_specs=[
            # col table: fetched per col-half step; clamped (and unused) on row-half steps.
            pl.BlockSpec((cblk, 1, width),
                         lambda c: (jnp.minimum(c, ncol_blocks - 1), 0, 0)),
            # row table: fetched per row-half step; clamped (and unused) on col-half steps.
            pl.BlockSpec((cblk, height),
                         lambda c: (jnp.maximum(c - ncol_blocks, 0), 0)),
        ],
        out_specs=pl.BlockSpec((cblk, height, width), lambda c: (c, 0, 0)),
        compiler_params=pltpu.CompilerParams(
            dimension_semantics=("parallel",),   # shards channel blocks over v7x's 2 TCs
        ),
    )(col_in, row_in)

    # Batch is pure replication of an identical slab: broadcast lazily so the
    # kernel (and HBM writeback) stays O(1) in batch; a consumer that truly
    # materializes (B, 2F, H, W) pays that copy itself, unavoidably.
    return jnp.broadcast_to(slab[None], (batch, 2 * num_pos_feats, height, width))


def position_embedding_learned_from_x(x, col_weight, row_weight):
    """Convenience wrapper matching the module's forward(x) interface.

    Only x.shape is used; x's data never enters the pallas_call.
    """
    b, _, h, w = x.shape
    return position_embedding_learned(col_weight, row_weight, batch=b, height=h, width=w)


if __name__ == "__main__":
    # Small, deterministic setup consistent with the module.
    B, C, H, W = 2, 4, 16, 16
    num_pos_feats = 32                      # module default is 256; small for the example

    key = jax.random.PRNGKey(0)
    k_row, k_col, k_x = jax.random.split(key, 3)

    # nn.init.uniform_ => U[0, 1)
    row_weight = jax.random.uniform(k_row, (100, num_pos_feats), dtype=jnp.float32)
    col_weight = jax.random.uniform(k_col, (100, num_pos_feats), dtype=jnp.float32)
    x = jax.random.normal(k_x, (B, C, H, W), dtype=jnp.float32)

    pos = position_embedding_learned_from_x(x, col_weight, row_weight)
    pos = jax.block_until_ready(pos)

    # Reference in plain JAX (same semantics as the PyTorch forward).
    x_emb = col_weight[:W]                                   # (W, F)
    y_emb = row_weight[:H]                                   # (H, F)
    ref = jnp.concatenate(
        [jnp.broadcast_to(x_emb[None, :, :], (H, W, num_pos_feats)),
         jnp.broadcast_to(y_emb[:, None, :], (H, W, num_pos_feats))],
        axis=-1,
    ).transpose(2, 0, 1)[None]
    ref = jnp.broadcast_to(ref, (B, 2 * num_pos_feats, H, W))

    assert pos.shape == (B, 2 * num_pos_feats, H, W)
    assert pos.dtype == col_weight.dtype
    assert jnp.array_equal(pos, ref), "mismatch vs reference"
    print("KERNEL_OK")
</pallas_src>

<mosaic_0001>
module attributes {stable_mosaic.version = 11 : i64} {
  func.func @_pos_embed_kernel(%arg0: i32, %arg1: memref<32x1x16xf32, #tpu.memory_space<vmem>>, %arg2: memref<32x16xf32, #tpu.memory_space<vmem>>, %arg3: memref<32x16x16xf32, #tpu.memory_space<vmem>>) attributes {dimension_semantics = [#tpu.dimension_semantics<parallel>], iteration_bounds = array<i64: 2>, scalar_prefetch = 0 : i64, scratch_operands = 0 : i64, tpu.core_type = #tpu.core_type<tc>, window_params = [{transform_indices = @transform_0, window_bounds = array<i64: 32, 1, 16>}, {transform_indices = @transform_1, window_bounds = array<i64: 32, 16>}, {transform_indices = @transform_2, window_bounds = array<i64: 32, 16, 16>}]} {
    %c1_i32 = arith.constant 1 : i32
    %0 = arith.cmpi slt, %arg0, %c1_i32 : i32
    %1 = arith.extui %0 : i1 to i32
    %c0_i32 = arith.constant 0 : i32
    %2 = arith.cmpi ne, %1, %c0_i32 : i32
    scf.if %2 {
      %c0 = arith.constant 0 : index
      %c0_2 = arith.constant 0 : index
      %c0_3 = arith.constant 0 : index
      %6 = vector.load %arg1[%c0, %c0_2, %c0_3] : memref<32x1x16xf32, #tpu.memory_space<vmem>>, vector<32x1x16xf32>
      %7 = vector.shape_cast %6 : vector<32x1x16xf32> to vector<32x1x16xf32>
      %8 = vector.broadcast %7 : vector<32x1x16xf32> to vector<32x16x16xf32>
      %c0_4 = arith.constant 0 : index
      %c0_5 = arith.constant 0 : index
      %c0_6 = arith.constant 0 : index
      %9 = vector.load %arg3[%c0_4, %c0_5, %c0_6] : memref<32x16x16xf32, #tpu.memory_space<vmem>>, vector<32x16x16xf32>
      tpu.vector_store %arg3[%c0_4, %c0_5, %c0_6], %8 {strides = array<i32>} : memref<32x16x16xf32, #tpu.memory_space<vmem>>, vector<32x16x16xf32>,
    } else {
    }
    %c1_i32_0 = arith.constant 1 : i32
    %3 = arith.cmpi sge, %arg0, %c1_i32_0 : i32
    %4 = arith.extui %3 : i1 to i32
    %c0_i32_1 = arith.constant 0 : i32
    %5 = arith.cmpi ne, %4, %c0_i32_1 : i32
    scf.if %5 {
      %c0 = arith.constant 0 : index
      %c0_2 = arith.constant 0 : index
      %6 = vector.load %arg2[%c0, %c0_2] : memref<32x16xf32, #tpu.memory_space<vmem>>, vector<32x16xf32>
      %7 = vector.shape_cast %6 : vector<32x16xf32> to vector<32x16x1xf32>
      %8 = vector.shape_cast %7 : vector<32x16x1xf32> to vector<32x16x1xf32>
      %9 = vector.broadcast %8 : vector<32x16x1xf32> to vector<32x16x16xf32>
      %c0_3 = arith.constant 0 : index
      %c0_4 = arith.constant 0 : index
      %c0_5 = arith.constant 0 : index
      %10 = vector.load %arg3[%c0_3, %c0_4, %c0_5] : memref<32x16x16xf32, #tpu.memory_space<vmem>>, vector<32x16x16xf32>
      tpu.vector_store %arg3[%c0_3, %c0_4, %c0_5], %9 {strides = array<i32>} : memref<32x16x16xf32, #tpu.memory_space<vmem>>, vector<32x16x16xf32>,
    } else {
    }
    return
  }
  func.func @transform_0(%arg0: i32) -> (i32, i32, i32) {
    %c0_i32 = arith.constant 0 : i32
    %0 = arith.minsi %arg0, %c0_i32 : i32
    %c0_i32_0 = arith.constant 0 : i32
    %c0_i32_1 = arith.constant 0 : i32
    %c0_i32_2 = arith.constant 0 : i32
    return %0, %c0_i32_0, %c0_i32_1 : i32, i32, i32
  }
  func.func @transform_1(%arg0: i32) -> (i32, i32) {
    %c1_i32 = arith.constant 1 : i32
    %0 = arith.subi %arg0, %c1_i32 : i32
    %c0_i32 = arith.constant 0 : i32
    %1 = arith.maxsi %0, %c0_i32 : i32
    %c0_i32_0 = arith.constant 0 : i32
    %c0_i32_1 = arith.constant 0 : i32
    return %1, %c0_i32_0 : i32, i32
  }
  func.func @transform_2(%arg0: i32) -> (i32, i32, i32) {
    %c0_i32 = arith.constant 0 : i32
    %c0_i32_0 = arith.constant 0 : i32
    %c0_i32_1 = arith.constant 0 : i32
    return %arg0, %c0_i32, %c0_i32_0 : i32, i32, i32
  }
}

</mosaic_0001>

<llo_original>
// kernel: tpu_custom_call.1
$region0: #{tpu_custom_call.1}
  #allocation0 [shape = 'u32[]', space=smem, size = 0x4, offset = 0x4, fixed_abs, tag = 'smem constant byte address 0x4 - core index']
  #allocation1 [shape = 'u32[144,128]{1,0:T(1,128)}', space=vmem, size = 0x12000, scoped, tag = 'internal scratch']
  %s0 = inlined_call_operand.vmem [shape: f32[32,1,16], index: 0, kind: input, shape index: {}]
  %s1 = inlined_call_operand.vmem [shape: f32[32,16], index: 1, kind: input, shape index: {}]
  %s2 = inlined_call_operand.vmem [shape: f32[64,16,16], index: 2, kind: output, shape index: {}]
  %s3 = sld [smem:[#allocation0]]
  $region49: #{tpu_custom_call.1} parent=0
    _
  %s5 = ssub.s32 1, %s3
  %s6 = scalar_select 0, %s5, %s3
  loop: start=0, step=1, limit=4
  $region2: #{tpu_custom_call.1} parent=0 // loop_pre_header
    _
  $region3: #{tpu_custom_call.1} parent=0 // loop_header
    %s8 = sphi 0, %s12
    %p9 = scmp.ge.s32.totalorder %s8, 4
    %s22 = sphi 0, %s24
    %s25 = sphi 0, %s22
    %s26 = sphi 0, %s25
    %s42 = sphi 0, %s26
    %s54 = sphi 0, %s56
    %s57 = sphi 0, %s54
    %s58 = sphi 0, %s57
    %s74 = sphi 0, %s58
    %s80 = sphi 0, %s82
    %s83 = sphi 0, %s80
    %s84 = sphi 0, %s83
    %s100 = sphi 0, %s84
  $region4: #{tpu_custom_call.1} parent=0 // loop_header_branch
    %11 = sbr.rel (%p9) target = $region8
  $region5: #{tpu_custom_call.1} parent=0 // loop_body
    %s13 = ssub.s32 %s8, 1
    %s14 = ssub.s32 %s8, 2
    %s15 = sadd.s32 %s8, 1
    %p16 = scmp.lt.s32.totalorder %s8, 0
    %s17 = scalar_select %p16, %s8, 0
    %p18 = scmp.lt.s32.totalorder %s15, 0
    %s19 = scalar_select %p18, %s15, 0
    %s20 = ssub.s32 %s17, %s19
    %p21 = scmp.eq.s32.totalorder %s20, 0
    %s23 = sadd.s32 %s22, 1
    %s24 = scalar_select %p21, %s22, %s23
    %p27 = pneg %p21
    %p28 = scmp.eq.s32.totalorder %s8, 1
    %p29 = por %p27, %p28
    %p30 = scmp.ne.s32.totalorder %s22, %s25
    %p31 = scmp.eq.s32.totalorder %s8, 0
    %p32 = por %p30, %p31
    %p33 = scmp.ne.s32.totalorder %s22, %s25
    %p34 = scmp.eq.s32.totalorder %s13, 1
    %p35 = por %p33, %p34
    %p36 = scmp.ne.s32.totalorder %s25, %s26
    %p37 = scmp.eq.s32.totalorder %s13, 0
    %p38 = por %p36, %p37
    %p39 = scmp.ne.s32.totalorder %s25, %s26
    %p40 = scmp.eq.s32.totalorder %s14, 1
    %p41 = por %p39, %p40
    %p43 = scmp.ne.s32.totalorder %s26, %s42
    %p44 = scmp.eq.s32.totalorder %s14, 0
    %p45 = por %p43, %p44
    %s46 = ssub.s32 %s8, 1
    %p47 = scmp.gt.s32.totalorder %s46, 0
    %s48 = scalar_select %p47, %s46, 0
    %s49 = ssub.s32 %s15, 1
    %p50 = scmp.gt.s32.totalorder %s49, 0
    %s51 = scalar_select %p50, %s49, 0
    %s52 = ssub.s32 %s48, %s51
    %p53 = scmp.eq.s32.totalorder %s52, 0
    %s55 = sadd.s32 %s54, 1
    %s56 = scalar_select %p53, %s54, %s55
    %p59 = pneg %p53
    %p60 = scmp.eq.s32.totalorder %s8, 1
    %p61 = por %p59, %p60
    %p62 = scmp.ne.s32.totalorder %s54, %s57
    %p63 = scmp.eq.s32.totalorder %s8, 0
    %p64 = por %p62, %p63
    %p65 = scmp.ne.s32.totalorder %s54, %s57
    %p66 = scmp.eq.s32.totalorder %s13, 1
    %p67 = por %p65, %p66
    %p68 = scmp.ne.s32.totalorder %s57, %s58
    %p69 = scmp.eq.s32.totalorder %s13, 0
    %p70 = por %p68, %p69
    %p71 = scmp.ne.s32.totalorder %s57, %s58
    %p72 = scmp.eq.s32.totalorder %s14, 1
    %p73 = por %p71, %p72
    %p75 = scmp.ne.s32.totalorder %s58, %s74
    %p76 = scmp.eq.s32.totalorder %s14, 0
    %p77 = por %p75, %p76
    %s78 = ssub.s32 %s8, %s15
    %p79 = scmp.eq.s32.totalorder %s78, 0
    %s81 = sadd.s32 %s80, 1
    %s82 = scalar_select %p79, %s80, %s81
    %p85 = pneg %p79
    %p86 = scmp.eq.s32.totalorder %s8, 1
    %p87 = por %p85, %p86
    %p88 = scmp.ne.s32.totalorder %s80, %s83
    %p89 = scmp.eq.s32.totalorder %s8, 0
    %p90 = por %p88, %p89
    %p91 = scmp.ne.s32.totalorder %s80, %s83
    %p92 = scmp.eq.s32.totalorder %s13, 1
    %p93 = por %p91, %p92
    %p94 = scmp.ne.s32.totalorder %s83, %s84
    %p95 = scmp.eq.s32.totalorder %s13, 0
    %p96 = por %p94, %p95
    %p97 = scmp.ne.s32.totalorder %s83, %s84
    %p98 = scmp.eq.s32.totalorder %s14, 1
    %p99 = por %p97, %p98
    %p101 = scmp.ne.s32.totalorder %s84, %s100
    %p102 = scmp.eq.s32.totalorder %s14, 0
    %p103 = por %p101, %p102
    %p104 = scmp.le.s32.totalorder 1, %s8
    %p105 = scmp.lt.s32.totalorder %s8, 3
    %p106 = pnand %p104, %p105
    %p107 = pneg %p106
    // Predicated region
    $region9: #{tpu_custom_call.1} parent=5 // pred_check
      _
    $region10: #{tpu_custom_call.1} parent=5 // pred_check_branch
      %109 = sbr.rel (%p106) target = $region12
    $region11: #{tpu_custom_call.1} parent=5 // pred_region
      %s110 = ssub.s32 %s8, 1
    $region12: #{tpu_custom_call.1} parent=5 // pred_fallthru
      _
    %p111 = scmp.lt.s32.totalorder %s8, 2
    // Predicated region
    $region13: #{tpu_custom_call.1} parent=5 // pred_check
      %p112 = pneg %p111
    $region14: #{tpu_custom_call.1} parent=5 // pred_check_branch
      %114 = sbr.rel (%p112) target = $region16
    $region15: #{tpu_custom_call.1} parent=5 // pred_region
      // Predicated region
      $region17: #{tpu_custom_call.1} parent=15 // pred_check
        %p115 = pneg %p32
      $region18: #{tpu_custom_call.1} parent=15 // pred_check_branch
        %117 = sbr.rel (%p115) target = $region20
      $region19: #{tpu_custom_call.1} parent=15 // pred_region
        %p118 = scmp.lt.s32.totalorder %s8, 0
        %s119 = scalar_select %p118, %s8, 0
        %s120 = smul.u32 32, %s119
        %p121 = scmp.lt.s32.totalorder %s120, 31
        %s122 = scalar_select %p121, %s120, 31
        %s123 = scalar_lea.vmem %s0, %s122
        %p124 = scmp.lt.s32.totalorder %s8, 0
        %s125 = scalar_select %p124, %s8, 0
        %s126 = smul.u32 32, %s125
      $region20: #{tpu_custom_call.1} parent=15 // pred_fallthru
        _
      // Predicated region
      $region21: #{tpu_custom_call.1} parent=15 // pred_check
        %p127 = pneg %p64
      $region22: #{tpu_custom_call.1} parent=15 // pred_check_branch
        %129 = sbr.rel (%p127) target = $region24
      $region23: #{tpu_custom_call.1} parent=15 // pred_region
        %s130 = ssub.s32 %s8, 1
        %p131 = scmp.gt.s32.totalorder %s130, 0
        %s132 = scalar_select %p131, %s130, 0
        %s133 = smul.u32 4, %s132
        %p134 = scmp.lt.s32.totalorder %s133, 3
        %s135 = scalar_select %p134, %s133, 3
        %s136 = smul.addr %s135, 8
        %s137 = scalar_lea.vmem %s1, %s136
        %s138 = ssub.s32 %s8, 1
        %p139 = scmp.gt.s32.totalorder %s138, 0
        %s140 = scalar_select %p139, %s138, 0
        %s141 = smul.u32 4, %s140
      $region24: #{tpu_custom_call.1} parent=15 // pred_fallthru
        _
    $region16: #{tpu_custom_call.1} parent=5 // pred_fallthru
      _
    %p142 = scmp.le.s32.totalorder 1, %s8
    %p143 = scmp.lt.s32.totalorder %s8, 3
    %p144 = pnand %p142, %p143
    %p145 = pneg %p144
    // Predicated region
    $region25: #{tpu_custom_call.1} parent=5 // pred_check
      _
    $region26: #{tpu_custom_call.1} parent=5 // pred_check_branch
      %147 = sbr.rel (%p144) target = $region28
    $region27: #{tpu_custom_call.1} parent=5 // pred_region
      %s148 = ssub.s32 %s8, 1
      %p149 = scmp.lt.s32.totalorder %s13, 0
      %s150 = scalar_select %p149, %s13, 0
      %s151 = smul.u32 32, %s150
      %p152 = scmp.lt.s32.totalorder %s151, 31
      %s153 = scalar_select %p152, %s151, 31
      %s154 = scalar_lea.vmem %s0, %s153
      %p155 = pneg %p38
      %p156 = pneg %p35
      %s157 = ssub.s32 %s13, 1
      %p158 = scmp.gt.s32.totalorder %s157, 0
      %s159 = scalar_select %p158, %s157, 0
      %s160 = smul.u32 4, %s159
      %p161 = scmp.lt.s32.totalorder %s160, 3
      %s162 = scalar_select %p161, %s160, 3
      %s163 = smul.addr %s162, 8
      %s164 = scalar_lea.vmem %s1, %s163
      %p165 = pneg %p70
      %p166 = pneg %p67
      %p167 = pneg %p96
      %p168 = pneg %p93
      %s169 = smul.u32 32, %s13
      %p170 = scmp.lt.s32.totalorder %s169, 63
      %s171 = scalar_select %p170, %s169, 63
      %s172 = smul.addr %s171, 2
      %s173 = smul.addr %s172, 8
      %s174 = scalar_lea.vmem %s2, %s173
      %p175 = scmp.lt.s32.totalorder %s13, 0
      %s176 = scalar_select %p175, %s13, 0
      %s177 = smul.u32 32, %s176
      %p178 = scmp.lt.s32.totalorder %s177, 31
      %s179 = scalar_select %p178, %s177, 31
      %s180 = scalar_lea.vmem %s0, %s179
      %p181 = scmp.lt.s32.totalorder %s13, 0
      %s182 = scalar_select %p181, %s13, 0
      %s183 = smul.u32 32, %s182
      %s184 = ssub.s32 %s13, 1
      %p185 = scmp.gt.s32.totalorder %s184, 0
      %s186 = scalar_select %p185, %s184, 0
      %s187 = smul.u32 4, %s186
      %p188 = scmp.lt.s32.totalorder %s187, 3
      %s189 = scalar_select %p188, %s187, 3
      %s190 = smul.addr %s189, 8
      %s191 = scalar_lea.vmem %s1, %s190
      %s192 = ssub.s32 %s13, 1
      %p193 = scmp.gt.s32.totalorder %s192, 0
      %s194 = scalar_select %p193, %s192, 0
      %s195 = smul.u32 4, %s194
      %s196 = smul.u32 32, %s13
      %p197 = scmp.lt.s32.totalorder %s196, 63
      %s198 = scalar_select %p197, %s196, 63
      %s199 = smul.addr %s198, 2
      %s200 = smul.addr %s199, 8
      %s201 = scalar_lea.vmem %s2, %s200
      %s202 = smul.u32 32, %s13
      %p203 = scmp.lt.s32.totalorder %s13, 1
      // Predicated region
      $region29: #{tpu_custom_call.1} parent=27 // pred_check
        %p204 = pneg %p203
      $region30: #{tpu_custom_call.1} parent=27 // pred_check_branch
        %206 = sbr.rel (%p204) target = $region32
      $region31: #{tpu_custom_call.1} parent=27 // pred_region
        %v207 = vld [vmem:[%s180] sm:$0x1]
        %v208 = vld [vmem:[%s180 + $0x1] sm:$0x1]
        %v209 = vld [vmem:[%s180 + $0x2] sm:$0x1]
        %v210 = vld [vmem:[%s180 + $0x3] sm:$0x1]
        %v211 = vld [vmem:[%s180 + $0x4] sm:$0x1]
        %v212 = vld [vmem:[%s180 + $0x5] sm:$0x1]
        %v213 = vld [vmem:[%s180 + $0x6] sm:$0x1]
        %v214 = vld [vmem:[%s180 + $0x7] sm:$0x1]
        %v215 = vld [vmem:[%s180 + $0x8] sm:$0x1]
        %v216 = vld [vmem:[%s180 + $0x9] sm:$0x1]
        %v217 = vld [vmem:[%s180 + $0xa] sm:$0x1]
        %v218 = vld [vmem:[%s180 + $0xb] sm:$0x1]
        %v219 = vld [vmem:[%s180 + $0xc] sm:$0x1]
        %v220 = vld [vmem:[%s180 + $0xd] sm:$0x1]
        %v221 = vld [vmem:[%s180 + $0xe] sm:$0x1]
        %v222 = vld [vmem:[%s180 + $0xf] sm:$0x1]
        %v223 = vld [vmem:[%s180 + $0x10] sm:$0x1]
        %v224 = vld [vmem:[%s180 + $0x11] sm:$0x1]
        %v225 = vld [vmem:[%s180 + $0x12] sm:$0x1]
        %v226 = vld [vmem:[%s180 + $0x13] sm:$0x1]
        %v227 = vld [vmem:[%s180 + $0x14] sm:$0x1]
        %v228 = vld [vmem:[%s180 + $0x15] sm:$0x1]
        %v229 = vld [vmem:[%s180 + $0x16] sm:$0x1]
        %v230 = vld [vmem:[%s180 + $0x17] sm:$0x1]
        %v231 = vld [vmem:[%s180 + $0x18] sm:$0x1]
        %v232 = vld [vmem:[%s180 + $0x19] sm:$0x1]
        %v233 = vld [vmem:[%s180 + $0x1a] sm:$0x1]
        %v234 = vld [vmem:[%s180 + $0x1b] sm:$0x1]
        %v235 = vld [vmem:[%s180 + $0x1c] sm:$0x1]
        %v236 = vld [vmem:[%s180 + $0x1d] sm:$0x1]
        %v237 = vld [vmem:[%s180 + $0x1e] sm:$0x1]
        %v238 = vld [vmem:[%s180 + $0x1f] sm:$0x1]
        %v271 = vlaneseq
        %v272 = vshrl.u32 %v271, 7
        %v273 = vsub.s32 0, %v272
        %v274 = vrot.slane %v207, %v273
        %v275 = vlaneseq
        %v276 = vshrl.u32 %v275, 7
        %v277 = vsub.s32 0, %v276
        %v278 = vrot.slane %v208, %v277
        %v279 = vlaneseq
        %v280 = vshrl.u32 %v279, 7
        %v281 = vsub.s32 0, %v280
        %v282 = vrot.slane %v209, %v281
        %v283 = vlaneseq
        %v284 = vshrl.u32 %v283, 7
        %v285 = vsub.s32 0, %v284
        %v286 = vrot.slane %v210, %v285
        %v287 = vlaneseq
        %v288 = vshrl.u32 %v287, 7
        %v289 = vsub.s32 0, %v288
        %v290 = vrot.slane %v211, %v289
        %v291 = vlaneseq
        %v292 = vshrl.u32 %v291, 7
        %v293 = vsub.s32 0, %v292
        %v294 = vrot.slane %v212, %v293
        %v295 = vlaneseq
        %v296 = vshrl.u32 %v295, 7
        %v297 = vsub.s32 0, %v296
        %v298 = vrot.slane %v213, %v297
        %v299 = vlaneseq
        %v300 = vshrl.u32 %v299, 7
        %v301 = vsub.s32 0, %v300
        %v302 = vrot.slane %v214, %v301
        %v303 = vlaneseq
        %v304 = vshrl.u32 %v303, 7
        %v305 = vsub.s32 0, %v304
        %v306 = vrot.slane %v215, %v305
        %v307 = vlaneseq
        %v308 = vshrl.u32 %v307, 7
        %v309 = vsub.s32 0, %v308
        %v310 = vrot.slane %v216, %v309
        %v311 = vlaneseq
        %v312 = vshrl.u32 %v311, 7
        %v313 = vsub.s32 0, %v312
        %v314 = vrot.slane %v217, %v313
        %v315 = vlaneseq
        %v316 = vshrl.u32 %v315, 7
        %v317 = vsub.s32 0, %v316
        %v318 = vrot.slane %v218, %v317
        %v319 = vlaneseq
        %v320 = vshrl.u32 %v319, 7
        %v321 = vsub.s32 0, %v320
        %v322 = vrot.slane %v219, %v321
        %v323 = vlaneseq
        %v324 = vshrl.u32 %v323, 7
        %v325 = vsub.s32 0, %v324
        %v326 = vrot.slane %v220, %v325
        %v327 = vlaneseq
        %v328 = vshrl.u32 %v327, 7
        %v329 = vsub.s32 0, %v328
        %v330 = vrot.slane %v221, %v329
        %v331 = vlaneseq
        %v332 = vshrl.u32 %v331, 7
        %v333 = vsub.s32 0, %v332
        %v334 = vrot.slane %v222, %v333
        %v335 = vlaneseq
        %v336 = vshrl.u32 %v335, 7
        %v337 = vsub.s32 0, %v336
        %v338 = vrot.slane %v223, %v337
        %v339 = vlaneseq
        %v340 = vshrl.u32 %v339, 7
        %v341 = vsub.s32 0, %v340
        %v342 = vrot.slane %v224, %v341
        %v343 = vlaneseq
        %v344 = vshrl.u32 %v343, 7
        %v345 = vsub.s32 0, %v344
        %v346 = vrot.slane %v225, %v345
        %v347 = vlaneseq
        %v348 = vshrl.u32 %v347, 7
        %v349 = vsub.s32 0, %v348
        %v350 = vrot.slane %v226, %v349
        %v351 = vlaneseq
        %v352 = vshrl.u32 %v351, 7
        %v353 = vsub.s32 0, %v352
        %v354 = vrot.slane %v227, %v353
        %v355 = vlaneseq
        %v356 = vshrl.u32 %v355, 7
        %v357 = vsub.s32 0, %v356
        %v358 = vrot.slane %v228, %v357
        %v359 = vlaneseq
        %v360 = vshrl.u32 %v359, 7
        %v361 = vsub.s32 0, %v360
        %v362 = vrot.slane %v229, %v361
        %v363 = vlaneseq
        %v364 = vshrl.u32 %v363, 7
        %v365 = vsub.s32 0, %v364
        %v366 = vrot.slane %v230, %v365
        %v367 = vlaneseq
        %v368 = vshrl.u32 %v367, 7
        %v369 = vsub.s32 0, %v368
        %v370 = vrot.slane %v231, %v369
        %v371 = vlaneseq
        %v372 = vshrl.u32 %v371, 7
        %v373 = vsub.s32 0, %v372
        %v374 = vrot.slane %v232, %v373
        %v375 = vlaneseq
        %v376 = vshrl.u32 %v375, 7
        %v377 = vsub.s32 0, %v376
        %v378 = vrot.slane %v233, %v377
        %v379 = vlaneseq
        %v380 = vshrl.u32 %v379, 7
        %v381 = vsub.s32 0, %v380
        %v382 = vrot.slane %v234, %v381
        %v383 = vlaneseq
        %v384 = vshrl.u32 %v383, 7
        %v385 = vsub.s32 0, %v384
        %v386 = vrot.slane %v235, %v385
        %v387 = vlaneseq
        %v388 = vshrl.u32 %v387, 7
        %v389 = vsub.s32 0, %v388
        %v390 = vrot.slane %v236, %v389
        %v391 = vlaneseq
        %v392 = vshrl.u32 %v391, 7
        %v393 = vsub.s32 0, %v392
        %v394 = vrot.slane %v237, %v393
        %v395 = vlaneseq
        %v396 = vshrl.u32 %v395, 7
        %v397 = vsub.s32 0, %v396
        %v398 = vrot.slane %v238, %v397
        %vm431 = vcmask 130048
        %432 = vst.msk [vmem:[%s201] sm:$0xff] %vm431, %v274
        %433 = vst.msk [vmem:[%s201 + $0x8] sm:$0xff] %vm431, %v274
        %434 = vst.msk [vmem:[%s201 + $0x10] sm:$0xff] %vm431, %v278
        %435 = vst.msk [vmem:[%s201 + $0x18] sm:$0xff] %vm431, %v278
        %436 = vst.msk [vmem:[%s201 + $0x20] sm:$0xff] %vm431, %v282
        %437 = vst.msk [vmem:[%s201 + $0x28] sm:$0xff] %vm431, %v282
        %438 = vst.msk [vmem:[%s201 + $0x30] sm:$0xff] %vm431, %v286
        %439 = vst.msk [vmem:[%s201 + $0x38] sm:$0xff] %vm431, %v286
        %440 = vst.msk [vmem:[%s201 + $0x40] sm:$0xff] %vm431, %v290
        %441 = vst.msk [vmem:[%s201 + $0x48] sm:$0xff] %vm431, %v290
        %442 = vst.msk [vmem:[%s201 + $0x50] sm:$0xff] %vm431, %v294
        %443 = vst.msk [vmem:[%s201 + $0x58] sm:$0xff] %vm431, %v294
        %444 = vst.msk [vmem:[%s201 + $0x60] sm:$0xff] %vm431, %v298
        %445 = vst.msk [vmem:[%s201 + $0x68] sm:$0xff] %vm431, %v298
        %446 = vst.msk [vmem:[%s201 + $0x70] sm:$0xff] %vm431, %v302
        %447 = vst.msk [vmem:[%s201 + $0x78] sm:$0xff] %vm431, %v302
        %448 = vst.msk [vmem:[%s201 + $0x80] sm:$0xff] %vm431, %v306
        %449 = vst.msk [vmem:[%s201 + $0x88] sm:$0xff] %vm431, %v306
        %450 = vst.msk [vmem:[%s201 + $0x90] sm:$0xff] %vm431, %v310
        %451 = vst.msk [vmem:[%s201 + $0x98] sm:$0xff] %vm431, %v310
        %452 = vst.msk [vmem:[%s201 + $0xa0] sm:$0xff] %vm431, %v314
        %453 = vst.msk [vmem:[%s201 + $0xa8] sm:$0xff] %vm431, %v314
        %454 = vst.msk [vmem:[%s201 + $0xb0] sm:$0xff] %vm431, %v318
        %455 = vst.msk [vmem:[%s201 + $0xb8] sm:$0xff] %vm431, %v318
        %456 = vst.msk [vmem:[%s201 + $0xc0] sm:$0xff] %vm431, %v322
        %457 = vst.msk [vmem:[%s201 + $0xc8] sm:$0xff] %vm431, %v322
        %458 = vst.msk [vmem:[%s201 + $0xd0] sm:$0xff] %vm431, %v326
        %459 = vst.msk [vmem:[%s201 + $0xd8] sm:$0xff] %vm431, %v326
        %460 = vst.msk [vmem:[%s201 + $0xe0] sm:$0xff] %vm431, %v330
        %461 = vst.msk [vmem:[%s201 + $0xe8] sm:$0xff] %vm431, %v330
        %462 = vst.msk [vmem:[%s201 + $0xf0] sm:$0xff] %vm431, %v334
        %463 = vst.msk [vmem:[%s201 + $0xf8] sm:$0xff] %vm431, %v334
        %464 = vst.msk [vmem:[%s201 + $0x100] sm:$0xff] %vm431, %v338
        %465 = vst.msk [vmem:[%s201 + $0x108] sm:$0xff] %vm431, %v338
        %466 = vst.msk [vmem:[%s201 + $0x110] sm:$0xff] %vm431, %v342
        %467 = vst.msk [vmem:[%s201 + $0x118] sm:$0xff] %vm431, %v342
        %468 = vst.msk [vmem:[%s201 + $0x120] sm:$0xff] %vm431, %v346
        %469 = vst.msk [vmem:[%s201 + $0x128] sm:$0xff] %vm431, %v346
        %470 = vst.msk [vmem:[%s201 + $0x130] sm:$0xff] %vm431, %v350
        %471 = vst.msk [vmem:[%s201 + $0x138] sm:$0xff] %vm431, %v350
        %472 = vst.msk [vmem:[%s201 + $0x140] sm:$0xff] %vm431, %v354
        %473 = vst.msk [vmem:[%s201 + $0x148] sm:$0xff] %vm431, %v354
        %474 = vst.msk [vmem:[%s201 + $0x150] sm:$0xff] %vm431, %v358
        %475 = vst.msk [vmem:[%s201 + $0x158] sm:$0xff] %vm431, %v358
        %476 = vst.msk [vmem:[%s201 + $0x160] sm:$0xff] %vm431, %v362
        %477 = vst.msk [vmem:[%s201 + $0x168] sm:$0xff] %vm431, %v362
        %478 = vst.msk [vmem:[%s201 + $0x170] sm:$0xff] %vm431, %v366
        %479 = vst.msk [vmem:[%s201 + $0x178] sm:$0xff] %vm431, %v366
        %480 = vst.msk [vmem:[%s201 + $0x180] sm:$0xff] %vm431, %v370
        %481 = vst.msk [vmem:[%s201 + $0x188] sm:$0xff] %vm431, %v370
        %482 = vst.msk [vmem:[%s201 + $0x190] sm:$0xff] %vm431, %v374
        %483 = vst.msk [vmem:[%s201 + $0x198] sm:$0xff] %vm431, %v374
        %484 = vst.msk [vmem:[%s201 + $0x1a0] sm:$0xff] %vm431, %v378
        %485 = vst.msk [vmem:[%s201 + $0x1a8] sm:$0xff] %vm431, %v378
        %486 = vst.msk [vmem:[%s201 + $0x1b0] sm:$0xff] %vm431, %v382
        %487 = vst.msk [vmem:[%s201 + $0x1b8] sm:$0xff] %vm431, %v382
        %488 = vst.msk [vmem:[%s201 + $0x1c0] sm:$0xff] %vm431, %v386
        %489 = vst.msk [vmem:[%s201 + $0x1c8] sm:$0xff] %vm431, %v386
        %490 = vst.msk [vmem:[%s201 + $0x1d0] sm:$0xff] %vm431, %v390
        %491 = vst.msk [vmem:[%s201 + $0x1d8] sm:$0xff] %vm431, %v390
        %492 = vst.msk [vmem:[%s201 + $0x1e0] sm:$0xff] %vm431, %v394
        %493 = vst.msk [vmem:[%s201 + $0x1e8] sm:$0xff] %vm431, %v394
        %494 = vst.msk [vmem:[%s201 + $0x1f0] sm:$0xff] %vm431, %v398
        %495 = vst.msk [vmem:[%s201 + $0x1f8] sm:$0xff] %vm431, %v398
      $region32: #{tpu_custom_call.1} parent=27 // pred_fallthru
        _
      %p496 = scmp.ge.s32.totalorder %s13, 1
      // Predicated region
      $region33: #{tpu_custom_call.1} parent=27 // pred_check
        %p497 = pneg %p496
      $region34: #{tpu_custom_call.1} parent=27 // pred_check_branch
        %499 = sbr.rel (%p497) target = $region36
      $region35: #{tpu_custom_call.1} parent=27 // pred_region
        %v500 = vld [vmem:[%s191] sm:$0xff]
        %v501 = vld [vmem:[%s191 + $0x8] sm:$0xff]
        %v502 = vld [vmem:[%s191 + $0x10] sm:$0xff]
        %v503 = vld [vmem:[%s191 + $0x18] sm:$0xff]
        %v504 = vlaneseq
        %v505 = vshrl.u32 %v504, 7
        %v506 = vsub.s32 0, %v505
        %v507 = vrot.slane %v500, %v506
        %509 = vbcast.lane.b32.xlu0 %v507, 256
        %v510 = vpop.permute.xlu0 %509
        %s512 = sor.u32 256, 8
        %513 = vbcast.lane.b32.xlu0 %v507, %s512
        %v514 = vpop.permute.xlu0 %513
        %v515 = vlaneseq
        %v516 = vshrl.u32 %v515, 7
        %v517 = vsub.s32 1, %v516
        %v518 = vrot.slane %v500, %v517
        %520 = vbcast.lane.b32.xlu0 %v518, 256
        %v521 = vpop.permute.xlu0 %520
        %s523 = sor.u32 256, 8
        %524 = vbcast.lane.b32.xlu0 %v518, %s523
        %v525 = vpop.permute.xlu0 %524
        %v526 = vlaneseq
        %v527 = vshrl.u32 %v526, 7
        %v528 = vsub.s32 2, %v527
        %v529 = vrot.slane %v500, %v528
        %531 = vbcast.lane.b32.xlu0 %v529, 256
        %v532 = vpop.permute.xlu0 %531
        %s534 = sor.u32 256, 8
        %535 = vbcast.lane.b32.xlu0 %v529, %s534
        %v536 = vpop.permute.xlu0 %535
        %v537 = vlaneseq
        %v538 = vshrl.u32 %v537, 7
        %v539 = vsub.s32 3, %v538
        %v540 = vrot.slane %v500, %v539
        %542 = vbcast.lane.b32.xlu0 %v540, 256
        %v543 = vpop.permute.xlu0 %542
        %s545 = sor.u32 256, 8
        %546 = vbcast.lane.b32.xlu0 %v540, %s545
        %v547 = vpop.permute.xlu0 %546
        %v548 = vlaneseq
        %v549 = vshrl.u32 %v548, 7
        %v550 = vsub.s32 4, %v549
        %v551 = vrot.slane %v500, %v550
        %553 = vbcast.lane.b32.xlu0 %v551, 256
        %v554 = vpop.permute.xlu0 %553
        %s556 = sor.u32 256, 8
        %557 = vbcast.lane.b32.xlu0 %v551, %s556
        %v558 = vpop.permute.xlu0 %557
        %v559 = vlaneseq
        %v560 = vshrl.u32 %v559, 7
        %v561 = vsub.s32 5, %v560
        %v562 = vrot.slane %v500, %v561
        %564 = vbcast.lane.b32.xlu0 %v562, 256
        %v565 = vpop.permute.xlu0 %564
        %s567 = sor.u32 256, 8
        %568 = vbcast.lane.b32.xlu0 %v562, %s567
        %v569 = vpop.permute.xlu0 %568
        %v570 = vlaneseq
        %v571 = vshrl.u32 %v570, 7
        %v572 = vsub.s32 6, %v571
        %v573 = vrot.slane %v500, %v572
        %575 = vbcast.lane.b32.xlu0 %v573, 256
        %v576 = vpop.permute.xlu0 %575
        %s578 = sor.u32 256, 8
        %579 = vbcast.lane.b32.xlu0 %v573, %s578
        %v580 = vpop.permute.xlu0 %579
        %v581 = vlaneseq
        %v582 = vshrl.u32 %v581, 7
        %v583 = vsub.s32 7, %v582
        %v584 = vrot.slane %v500, %v583
        %586 = vbcast.lane.b32.xlu0 %v584, 256
        %v587 = vpop.permute.xlu0 %586
        %s589 = sor.u32 256, 8
        %590 = vbcast.lane.b32.xlu0 %v584, %s589
        %v591 = vpop.permute.xlu0 %590
        %v592 = vlaneseq
        %v593 = vshrl.u32 %v592, 7
        %v594 = vsub.s32 0, %v593
        %v595 = vrot.slane %v501, %v594
        %597 = vbcast.lane.b32.xlu0 %v595, 256
        %v598 = vpop.permute.xlu0 %597
        %s600 = sor.u32 256, 8
        %601 = vbcast.lane.b32.xlu0 %v595, %s600
        %v602 = vpop.permute.xlu0 %601
        %v603 = vlaneseq
        %v604 = vshrl.u32 %v603, 7
        %v605 = vsub.s32 1, %v604
        %v606 = vrot.slane %v501, %v605
        %608 = vbcast.lane.b32.xlu0 %v606, 256
        %v609 = vpop.permute.xlu0 %608
        %s611 = sor.u32 256, 8
        %612 = vbcast.lane.b32.xlu0 %v606, %s611
        %v613 = vpop.permute.xlu0 %612
        %v614 = vlaneseq
        %v615 = vshrl.u32 %v614, 7
        %v616 = vsub.s32 2, %v615
        %v617 = vrot.slane %v501, %v616
        %619 = vbcast.lane.b32.xlu0 %v617, 256
        %v620 = vpop.permute.xlu0 %619
        %s622 = sor.u32 256, 8
        %623 = vbcast.lane.b32.xlu0 %v617, %s622
        %v624 = vpop.permute.xlu0 %623
        %v625 = vlaneseq
        %v626 = vshrl.u32 %v625, 7
        %v627 = vsub.s32 3, %v626
        %v628 = vrot.slane %v501, %v627
        %630 = vbcast.lane.b32.xlu0 %v628, 256
        %v631 = vpop.permute.xlu0 %630
        %s633 = sor.u32 256, 8
        %634 = vbcast.lane.b32.xlu0 %v628, %s633
        %v635 = vpop.permute.xlu0 %634
        %v636 = vlaneseq
        %v637 = vshrl.u32 %v636, 7
        %v638 = vsub.s32 4, %v637
        %v639 = vrot.slane %v501, %v638
        %641 = vbcast.lane.b32.xlu0 %v639, 256
        %v642 = vpop.permute.xlu0 %641
        %s644 = sor.u32 256, 8
        %645 = vbcast.lane.b32.xlu0 %v639, %s644
        %v646 = vpop.permute.xlu0 %645
        %v647 = vlaneseq
        %v648 = vshrl.u32 %v647, 7
        %v649 = vsub.s32 5, %v648
        %v650 = vrot.slane %v501, %v649
        %652 = vbcast.lane.b32.xlu0 %v650, 256
        %v653 = vpop.permute.xlu0 %652
        %s655 = sor.u32 256, 8
        %656 = vbcast.lane.b32.xlu0 %v650, %s655
        %v657 = vpop.permute.xlu0 %656
        %v658 = vlaneseq
        %v659 = vshrl.u32 %v658, 7
        %v660 = vsub.s32 6, %v659
        %v661 = vrot.slane %v501, %v660
        %663 = vbcast.lane.b32.xlu0 %v661, 256
        %v664 = vpop.permute.xlu0 %663
        %s666 = sor.u32 256, 8
        %667 = vbcast.lane.b32.xlu0 %v661, %s666
        %v668 = vpop.permute.xlu0 %667
        %v669 = vlaneseq
        %v670 = vshrl.u32 %v669, 7
        %v671 = vsub.s32 7, %v670
        %v672 = vrot.slane %v501, %v671
        %674 = vbcast.lane.b32.xlu0 %v672, 256
        %v675 = vpop.permute.xlu0 %674
        %s677 = sor.u32 256, 8
        %678 = vbcast.lane.b32.xlu0 %v672, %s677
        %v679 = vpop.permute.xlu0 %678
        %v680 = vlaneseq
        %v681 = vshrl.u32 %v680, 7
        %v682 = vsub.s32 0, %v681
        %v683 = vrot.slane %v502, %v682
        %685 = vbcast.lane.b32.xlu0 %v683, 256
        %v686 = vpop.permute.xlu0 %685
        %s688 = sor.u32 256, 8
        %689 = vbcast.lane.b32.xlu0 %v683, %s688
        %v690 = vpop.permute.xlu0 %689
        %v691 = vlaneseq
        %v692 = vshrl.u32 %v691, 7
        %v693 = vsub.s32 1, %v692
        %v694 = vrot.slane %v502, %v693
        %696 = vbcast.lane.b32.xlu0 %v694, 256
        %v697 = vpop.permute.xlu0 %696
        %s699 = sor.u32 256, 8
        %700 = vbcast.lane.b32.xlu0 %v694, %s699
        %v701 = vpop.permute.xlu0 %700
        %v702 = vlaneseq
        %v703 = vshrl.u32 %v702, 7
        %v704 = vsub.s32 2, %v703
        %v705 = vrot.slane %v502, %v704
        %707 = vbcast.lane.b32.xlu0 %v705, 256
        %v708 = vpop.permute.xlu0 %707
        %s710 = sor.u32 256, 8
        %711 = vbcast.lane.b32.xlu0 %v705, %s710
        %v712 = vpop.permute.xlu0 %711
        %v713 = vlaneseq
        %v714 = vshrl.u32 %v713, 7
        %v715 = vsub.s32 3, %v714
        %v716 = vrot.slane %v502, %v715
        %718 = vbcast.lane.b32.xlu0 %v716, 256
        %v719 = vpop.permute.xlu0 %718
        %s721 = sor.u32 256, 8
        %722 = vbcast.lane.b32.xlu0 %v716, %s721
        %v723 = vpop.permute.xlu0 %722
        %v724 = vlaneseq
        %v725 = vshrl.u32 %v724, 7
        %v726 = vsub.s32 4, %v725
        %v727 = vrot.slane %v502, %v726
        %729 = vbcast.lane.b32.xlu0 %v727, 256
        %v730 = vpop.permute.xlu0 %729
        %s732 = sor.u32 256, 8
        %733 = vbcast.lane.b32.xlu0 %v727, %s732
        %v734 = vpop.permute.xlu0 %733
        %v735 = vlaneseq
        %v736 = vshrl.u32 %v735, 7
        %v737 = vsub.s32 5, %v736
        %v738 = vrot.slane %v502, %v737
        %740 = vbcast.lane.b32.xlu0 %v738, 256
        %v741 = vpop.permute.xlu0 %740
        %s743 = sor.u32 256, 8
        %744 = vbcast.lane.b32.xlu0 %v738, %s743
        %v745 = vpop.permute.xlu0 %744
        %v746 = vlaneseq
        %v747 = vshrl.u32 %v746, 7
        %v748 = vsub.s32 6, %v747
        %v749 = vrot.slane %v502, %v748
        %751 = vbcast.lane.b32.xlu0 %v749, 256
        %v752 = vpop.permute.xlu0 %751
        %s754 = sor.u32 256, 8
        %755 = vbcast.lane.b32.xlu0 %v749, %s754
        %v756 = vpop.permute.xlu0 %755
        %v757 = vlaneseq
        %v758 = vshrl.u32 %v757, 7
        %v759 = vsub.s32 7, %v758
        %v760 = vrot.slane %v502, %v759
        %762 = vbcast.lane.b32.xlu0 %v760, 256
        %v763 = vpop.permute.xlu0 %762
        %s765 = sor.u32 256, 8
        %766 = vbcast.lane.b32.xlu0 %v760, %s765
        %v767 = vpop.permute.xlu0 %766
        %v768 = vlaneseq
        %v769 = vshrl.u32 %v768, 7
        %v770 = vsub.s32 0, %v769
        %v771 = vrot.slane %v503, %v770
        %773 = vbcast.lane.b32.xlu0 %v771, 256
        %v774 = vpop.permute.xlu0 %773
        %s776 = sor.u32 256, 8
        %777 = vbcast.lane.b32.xlu0 %v771, %s776
        %v778 = vpop.permute.xlu0 %777
        %v779 = vlaneseq
        %v780 = vshrl.u32 %v779, 7
        %v781 = vsub.s32 1, %v780
        %v782 = vrot.slane %v503, %v781
        %784 = vbcast.lane.b32.xlu0 %v782, 256
        %v785 = vpop.permute.xlu0 %784
        %s787 = sor.u32 256, 8
        %788 = vbcast.lane.b32.xlu0 %v782, %s787
        %v789 = vpop.permute.xlu0 %788
        %v790 = vlaneseq
        %v791 = vshrl.u32 %v790, 7
        %v792 = vsub.s32 2, %v791
        %v793 = vrot.slane %v503, %v792
        %795 = vbcast.lane.b32.xlu0 %v793, 256
        %v796 = vpop.permute.xlu0 %795
        %s798 = sor.u32 256, 8
        %799 = vbcast.lane.b32.xlu0 %v793, %s798
        %v800 = vpop.permute.xlu0 %799
        %v801 = vlaneseq
        %v802 = vshrl.u32 %v801, 7
        %v803 = vsub.s32 3, %v802
        %v804 = vrot.slane %v503, %v803
        %806 = vbcast.lane.b32.xlu0 %v804, 256
        %v807 = vpop.permute.xlu0 %806
        %s809 = sor.u32 256, 8
        %810 = vbcast.lane.b32.xlu0 %v804, %s809
        %v811 = vpop.permute.xlu0 %810
        %v812 = vlaneseq
        %v813 = vshrl.u32 %v812, 7
        %v814 = vsub.s32 4, %v813
        %v815 = vrot.slane %v503, %v814
        %817 = vbcast.lane.b32.xlu0 %v815, 256
        %v818 = vpop.permute.xlu0 %817
        %s820 = sor.u32 256, 8
        %821 = vbcast.lane.b32.xlu0 %v815, %s820
        %v822 = vpop.permute.xlu0 %821
        %v823 = vlaneseq
        %v824 = vshrl.u32 %v823, 7
        %v825 = vsub.s32 5, %v824
        %v826 = vrot.slane %v503, %v825
        %828 = vbcast.lane.b32.xlu0 %v826, 256
        %v829 = vpop.permute.xlu0 %828
        %s831 = sor.u32 256, 8
        %832 = vbcast.lane.b32.xlu0 %v826, %s831
        %v833 = vpop.permute.xlu0 %832
        %v834 = vlaneseq
        %v835 = vshrl.u32 %v834, 7
        %v836 = vsub.s32 6, %v835
        %v837 = vrot.slane %v503, %v836
        %839 = vbcast.lane.b32.xlu0 %v837, 256
        %v840 = vpop.permute.xlu0 %839
        %s842 = sor.u32 256, 8
        %843 = vbcast.lane.b32.xlu0 %v837, %s842
        %v844 = vpop.permute.xlu0 %843
        %v845 = vlaneseq
        %v846 = vshrl.u32 %v845, 7
        %v847 = vsub.s32 7, %v846
        %v848 = vrot.slane %v503, %v847
        %850 = vbcast.lane.b32.xlu0 %v848, 256
        %v851 = vpop.permute.xlu0 %850
        %s853 = sor.u32 256, 8
        %854 = vbcast.lane.b32.xlu0 %v848, %s853
        %v855 = vpop.permute.xlu0 %854
        %vm856 = vcmask 130048
        %857 = vst.msk [vmem:[%s201] sm:$0xff] %vm856, %v510
        %858 = vst.msk [vmem:[%s201 + $0x8] sm:$0xff] %vm856, %v514
        %859 = vst.msk [vmem:[%s201 + $0x10] sm:$0xff] %vm856, %v521
        %860 = vst.msk [vmem:[%s201 + $0x18] sm:$0xff] %vm856, %v525
        %861 = vst.msk [vmem:[%s201 + $0x20] sm:$0xff] %vm856, %v532
        %862 = vst.msk [vmem:[%s201 + $0x28] sm:$0xff] %vm856, %v536
        %863 = vst.msk [vmem:[%s201 + $0x30] sm:$0xff] %vm856, %v543
        %864 = vst.msk [vmem:[%s201 + $0x38] sm:$0xff] %vm856, %v547
        %865 = vst.msk [vmem:[%s201 + $0x40] sm:$0xff] %vm856, %v554
        %866 = vst.msk [vmem:[%s201 + $0x48] sm:$0xff] %vm856, %v558
        %867 = vst.msk [vmem:[%s201 + $0x50] sm:$0xff] %vm856, %v565
        %868 = vst.msk [vmem:[%s201 + $0x58] sm:$0xff] %vm856, %v569
        %869 = vst.msk [vmem:[%s201 + $0x60] sm:$0xff] %vm856, %v576
        %870 = vst.msk [vmem:[%s201 + $0x68] sm:$0xff] %vm856, %v580
        %871 = vst.msk [vmem:[%s201 + $0x70] sm:$0xff] %vm856, %v587
        %872 = vst.msk [vmem:[%s201 + $0x78] sm:$0xff] %vm856, %v591
        %873 = vst.msk [vmem:[%s201 + $0x80] sm:$0xff] %vm856, %v598
        %874 = vst.msk [vmem:[%s201 + $0x88] sm:$0xff] %vm856, %v602
        %875 = vst.msk [vmem:[%s201 + $0x90] sm:$0xff] %vm856, %v609
        %876 = vst.msk [vmem:[%s201 + $0x98] sm:$0xff] %vm856, %v613
        %877 = vst.msk [vmem:[%s201 + $0xa0] sm:$0xff] %vm856, %v620
        %878 = vst.msk [vmem:[%s201 + $0xa8] sm:$0xff] %vm856, %v624
        %879 = vst.msk [vmem:[%s201 + $0xb0] sm:$0xff] %vm856, %v631
        %880 = vst.msk [vmem:[%s201 + $0xb8] sm:$0xff] %vm856, %v635
        %881 = vst.msk [vmem:[%s201 + $0xc0] sm:$0xff] %vm856, %v642
        %882 = vst.msk [vmem:[%s201 + $0xc8] sm:$0xff] %vm856, %v646
        %883 = vst.msk [vmem:[%s201 + $0xd0] sm:$0xff] %vm856, %v653
        %884 = vst.msk [vmem:[%s201 + $0xd8] sm:$0xff] %vm856, %v657
        %885 = vst.msk [vmem:[%s201 + $0xe0] sm:$0xff] %vm856, %v664
        %886 = vst.msk [vmem:[%s201 + $0xe8] sm:$0xff] %vm856, %v668
        %887 = vst.msk [vmem:[%s201 + $0xf0] sm:$0xff] %vm856, %v675
        %888 = vst.msk [vmem:[%s201 + $0xf8] sm:$0xff] %vm856, %v679
        %889 = vst.msk [vmem:[%s201 + $0x100] sm:$0xff] %vm856, %v686
        %890 = vst.msk [vmem:[%s201 + $0x108] sm:$0xff] %vm856, %v690
        %891 = vst.msk [vmem:[%s201 + $0x110] sm:$0xff] %vm856, %v697
        %892 = vst.msk [vmem:[%s201 + $0x118] sm:$0xff] %vm856, %v701
        %893 = vst.msk [vmem:[%s201 + $0x120] sm:$0xff] %vm856, %v708
        %894 = vst.msk [vmem:[%s201 + $0x128] sm:$0xff] %vm856, %v712
        %895 = vst.msk [vmem:[%s201 + $0x130] sm:$0xff] %vm856, %v719
        %896 = vst.msk [vmem:[%s201 + $0x138] sm:$0xff] %vm856, %v723
        %897 = vst.msk [vmem:[%s201 + $0x140] sm:$0xff] %vm856, %v730
        %898 = vst.msk [vmem:[%s201 + $0x148] sm:$0xff] %vm856, %v734
        %899 = vst.msk [vmem:[%s201 + $0x150] sm:$0xff] %vm856, %v741
        %900 = vst.msk [vmem:[%s201 + $0x158] sm:$0xff] %vm856, %v745
        %901 = vst.msk [vmem:[%s201 + $0x160] sm:$0xff] %vm856, %v752
        %902 = vst.msk [vmem:[%s201 + $0x168] sm:$0xff] %vm856, %v756
        %903 = vst.msk [vmem:[%s201 + $0x170] sm:$0xff] %vm856, %v763
        %904 = vst.msk [vmem:[%s201 + $0x178] sm:$0xff] %vm856, %v767
        %905 = vst.msk [vmem:[%s201 + $0x180] sm:$0xff] %vm856, %v774
        %906 = vst.msk [vmem:[%s201 + $0x188] sm:$0xff] %vm856, %v778
        %907 = vst.msk [vmem:[%s201 + $0x190] sm:$0xff] %vm856, %v785
        %908 = vst.msk [vmem:[%s201 + $0x198] sm:$0xff] %vm856, %v789
        %909 = vst.msk [vmem:[%s201 + $0x1a0] sm:$0xff] %vm856, %v796
        %910 = vst.msk [vmem:[%s201 + $0x1a8] sm:$0xff] %vm856, %v800
        %911 = vst.msk [vmem:[%s201 + $0x1b0] sm:$0xff] %vm856, %v807
        %912 = vst.msk [vmem:[%s201 + $0x1b8] sm:$0xff] %vm856, %v811
        %913 = vst.msk [vmem:[%s201 + $0x1c0] sm:$0xff] %vm856, %v818
        %914 = vst.msk [vmem:[%s201 + $0x1c8] sm:$0xff] %vm856, %v822
        %915 = vst.msk [vmem:[%s201 + $0x1d0] sm:$0xff] %vm856, %v829
        %916 = vst.msk [vmem:[%s201 + $0x1d8] sm:$0xff] %vm856, %v833
        %917 = vst.msk [vmem:[%s201 + $0x1e0] sm:$0xff] %vm856, %v840
        %918 = vst.msk [vmem:[%s201 + $0x1e8] sm:$0xff] %vm856, %v844
        %919 = vst.msk [vmem:[%s201 + $0x1f0] sm:$0xff] %vm856, %v851
        %920 = vst.msk [vmem:[%s201 + $0x1f8] sm:$0xff] %vm856, %v855
      $region36: #{tpu_custom_call.1} parent=27 // pred_fallthru
        _
      %s921 = smul.u32 32, %s13
      %p922 = scmp.lt.s32.totalorder %s921, 63
      %s923 = scalar_select %p922, %s921, 63
      %s924 = smul.addr %s923, 2
      %s925 = smul.addr %s924, 8
      %s926 = scalar_lea.vmem %s2, %s925
      // Predicated region
      $region37: #{tpu_custom_call.1} parent=27 // pred_check
        %p927 = pneg %p93
      $region38: #{tpu_custom_call.1} parent=27 // pred_check_branch
        %929 = sbr.rel (%p927) target = $region40
      $region39: #{tpu_custom_call.1} parent=27 // pred_region
        %s930 = smul.u32 32, %s13
      $region40: #{tpu_custom_call.1} parent=27 // pred_fallthru
        _
    $region28: #{tpu_custom_call.1} parent=5 // pred_fallthru
      _
    %p931 = scmp.le.s32.totalorder 2, %s8
    // Predicated region
    $region41: #{tpu_custom_call.1} parent=5 // pred_check
      %p932 = pneg %p931
    $region42: #{tpu_custom_call.1} parent=5 // pred_check_branch
      %934 = sbr.rel (%p932) target = $region44
    $region43: #{tpu_custom_call.1} parent=5 // pred_region
      %s935 = ssub.s32 %s8, 2
      // Predicated region
      $region45: #{tpu_custom_call.1} parent=43 // pred_check
        %p936 = pneg %p99
      $region46: #{tpu_custom_call.1} parent=43 // pred_check_branch
        %938 = sbr.rel (%p936) target = $region48
      $region47: #{tpu_custom_call.1} parent=43 // pred_region
        %s939 = smul.u32 32, %s14
        %p940 = scmp.lt.s32.totalorder %s939, 63
        %s941 = scalar_select %p940, %s939, 63
        %s942 = smul.addr %s941, 2
        %s943 = smul.addr %s942, 8
        %s944 = scalar_lea.vmem %s2, %s943
      $region48: #{tpu_custom_call.1} parent=43 // pred_fallthru
        _
    $region44: #{tpu_custom_call.1} parent=5 // pred_fallthru
      _
  $region6: #{tpu_custom_call.1} parent=0 // loop_footer
    %s12 = sadd.s32 1, %s8
  $region7: #{tpu_custom_call.1} parent=0 // loop_footer_branch
    %7 = sbr.rel target = $region3
  $region8: #{tpu_custom_call.1} parent=0 // loop_exit
    _

</llo_original>
